<compile_context>
chip_gen: v7x
topology: tpu7x:2x2x1
jax: 0.10.0
libtpu: 0.0.40
codegen_flags: <defaults>
</compile_context>

<pallas_src>
import functools

import jax
import jax.numpy as jnp
from jax.experimental import pallas as pl
from jax.experimental.pallas import tpu as pltpu

_LANE = 128                      # f32 vreg lane width
_MAX_BLOCK_BYTES = 512 * 1024    # per-grid-step output block budget (v7x-safe)
_GOLDEN = 0x9E3779B9             # splitmix32 increment


def _i32c(v):
    """Python int (any size) -> wrapped int32 constant."""
    v &= 0xFFFFFFFF
    return jnp.int32(v - (1 << 32) if v >= (1 << 31) else v)


def _lsr(x, k):
    """Logical right shift of an int32 array by a constant k."""
    return jax.lax.shift_right_logical(x, jnp.full(x.shape, k, jnp.int32))


def _premix_seed(seed_arr):
    """Scramble the base seed (fmix32); plain XLA, runs outside the kernel."""
    x = seed_arr
    x = (x ^ _lsr(x, 16)) * _i32c(0x85EBCA6B)
    x = (x ^ _lsr(x, 13)) * _i32c(0xC2B2AE35)
    x = x ^ _lsr(x, 16)
    return x


def _dropout_mask_kernel(seed_ref, o_ref, *, thresh, bt, lanes):
    """seed_ref: SMEM i32[1]; o_ref: VMEM (bt, lanes) block of the output.

    Element (b, l) of grid step g hashes (seed, (g*bt + b)*lanes + l) and is
    kept (1.0) iff its top-23 uniform bits are >= thresh = round(p * 2**23).
    """
    row = jax.lax.broadcasted_iota(jnp.int32, (bt, lanes), 0)
    col = jax.lax.broadcasted_iota(jnp.int32, (bt, lanes), 1)
    # x = seed + GOLDEN * global_index  (mod 2**32); the *lanes and *GOLDEN
    # multiplies are folded into compile-time constants (2 vmul + 2 vadd).
    base = seed_ref[0] + pl.program_id(0) * _i32c(bt * lanes * _GOLDEN)
    x = base + row * _i32c(lanes * _GOLDEN) + col * _i32c(_GOLDEN)
    # splitmix32-style finalizer (int32 arithmetic wraps mod 2**32).
    x = (x ^ _lsr(x, 16)) * _i32c(0x7FEB352D)
    x = (x ^ _lsr(x, 15)) * _i32c(0x846CA68B)
    x = x ^ _lsr(x, 16)
    r23 = _lsr(x, 9)                                    # uniform in [0, 2**23)
    o_ref[...] = (r23 >= thresh).astype(o_ref.dtype)    # keep prob = 1 - p


def _block_rows(num_masks, lanes):
    """(padded batch, rows per grid step) for a lane-dense (bt, lanes) block."""
    max_rows = max(8, (_MAX_BLOCK_BYTES // (lanes * 4)) // 8 * 8)
    if num_masks <= max_rows:
        # Single block equal to the full array dims (no (8,128) constraint).
        return num_masks, num_masks
    bt = max_rows
    b_pad = -(-num_masks // bt) * bt
    return b_pad, bt


@functools.lru_cache(maxsize=None)
def _build_mask_fn(num_masks, n_out, lanes, thresh, dtype_name):
    """Jitted fn: i32[1] base seed -> (num_masks, n_out) {0,1} mask array."""
    out_dtype = jnp.dtype(dtype_name)
    b_pad, bt = _block_rows(num_masks, lanes)
    kernel = functools.partial(_dropout_mask_kernel,
                               thresh=thresh, bt=bt, lanes=lanes)
    call = pl.pallas_call(
        kernel,
        out_shape=jax.ShapeDtypeStruct((b_pad, lanes), out_dtype),
        grid=(b_pad // bt,),
        in_specs=[pl.BlockSpec(memory_space=pltpu.MemorySpace.SMEM)],  # seed
        out_specs=pl.BlockSpec((bt, lanes), lambda i: (i, 0)),
        compiler_params=pltpu.CompilerParams(
            dimension_semantics=("parallel",)),   # 2 TCs on v7x at large B
    )

    def run(seed_arr):                            # i32[1] raw base seed
        masks = call(_premix_seed(seed_arr))
        if num_masks != b_pad or n_out != lanes:
            masks = masks[:num_masks, :n_out]
        return masks

    return jax.jit(run)


class TreecutGenerator:
    """JAX/Pallas port of the PyTorch TreecutGenerator (forward pass)."""

    def __init__(self, dependence, masks, codewords, dropout_rate=0.1,
                 base_seed=0, prefetch=256, out_dtype=jnp.float32):
        self.dropout_rate = float(dropout_rate)
        self.n_intnl_node, self.n_param = masks.shape
        self._lanes = -(-self.n_intnl_node // _LANE) * _LANE
        self._dtype = jnp.dtype(out_dtype)
        # Buffers kept for fidelity with the PyTorch __init__ (forward() does
        # not use them; they feed get_randomcut()).
        self.dependence = jnp.asarray(dependence, jnp.float32)
        self.dependence_cnt = self.dependence.sum(axis=1)
        m = jnp.asarray(masks).astype(jnp.bool_)[None]
        self.masks = jnp.concatenate((~m, m), axis=0)
        self.codewords = jnp.asarray(codewords)
        # Stateful (torch-like global RNG) path for forward(seed=None).
        self._base_seed = int(base_seed)
        self._prefetch = max(1, int(prefetch))
        self._refills = 0
        self._stream = {}  # resolved p -> {"masks": (prefetch, n), "i": int}
        # TODO(synk): get_randomcut()'s torch.where(codewords[mask]) returns a
        # variable-length (data-dependent shape) index vector; not implemented
        # as a kernel.

    def _resolve_p(self, p):
        p = self.dropout_rate if p is None else float(p)
        p = min(max(p, 0.0), 1.0)
        return p, int(round(p * (1 << 23)))

    def forward_batch(self, num_masks, seed=0, p=None):
        """Generate `num_masks` independent dropout masks in one kernel launch."""
        num_masks = int(num_masks)
        _, thresh = self._resolve_p(p)
        fn = _build_mask_fn(num_masks, self.n_intnl_node, self._lanes, thresh,
                            self._dtype.name)
        seed_arr = jnp.asarray(seed, jnp.int32).reshape(1)
        return fn(seed_arr)

    def forward(self, seed=None, p=None):
        """Single dropout mask of shape (n_intnl_node,).

        seed=None (torch-like stateful): draws from an internal cache refilled
        every `prefetch` calls with one batched launch.  Pass an explicit seed
        for a deterministic, reproducible mask.
        """
        if seed is not None:
            return self.forward_batch(1, seed=seed, p=p)[0]
        p_res, _ = self._resolve_p(p)
        st = self._stream.get(p_res)
        if st is None or st["i"] >= st["masks"].shape[0]:
            batch = self.forward_batch(self._prefetch,
                                       seed=self._base_seed + self._refills,
                                       p=p_res)
            self._refills += 1
            st = {"masks": batch, "i": 0}
            self._stream[p_res] = st
        mask = st["masks"][st["i"]]
        st["i"] += 1
        return mask

    __call__ = forward


if __name__ == "__main__":
    key = jax.random.PRNGKey(0)
    n_intnl_node, n_param, n_labels = 32, 16, 8
    k1, k2, k3 = jax.random.split(key, 3)

    # Deterministic synthetic "tree" structure (shapes implied by __init__).
    dependence = (jax.random.uniform(k1, (n_intnl_node, n_intnl_node)) < 0.2
                  ).astype(jnp.float32)
    masks = (jax.random.uniform(k2, (n_intnl_node, n_param)) < 0.5
             ).astype(jnp.int32)
    codewords = (jax.random.uniform(k3, (n_param, n_labels)) < 0.5
                 ).astype(jnp.int32)

    gen = TreecutGenerator(dependence, masks, codewords, dropout_rate=0.1)

    # Single mask (default p = dropout_rate), deterministic w.r.t. seed.
    out = jax.block_until_ready(gen.forward(seed=0))
    assert out.shape == (n_intnl_node,) and out.dtype == jnp.float32
    assert bool(jnp.all((out == 0.0) | (out == 1.0)))
    out_again = jax.block_until_ready(gen.forward(seed=0))
    assert bool(jnp.all(out == out_again))

    # Exact edge cases: p=0 keeps everything, p=1 drops everything.
    assert bool(jnp.all(jax.block_until_ready(gen.forward(seed=3, p=0.0)) == 1.0))
    assert bool(jnp.all(jax.block_until_ready(gen.forward(seed=4, p=1.0)) == 0.0))

    # Collapsed single-block batched path: 64 masks, one launch, one grid step.
    B = 64
    batch = jax.block_until_ready(gen.forward_batch(B, seed=100, p=0.5))
    assert batch.shape == (B, n_intnl_node) and batch.dtype == jnp.float32
    assert bool(jnp.all((batch == 0.0) | (batch == 1.0)))
    keep = float(batch.mean())
    assert 0.3 < keep < 0.7, keep  # 2048 Bernoulli(0.5) samples, very loose band

    # Multi-block grid path (batch larger than one block of rows).
    big = jax.block_until_ready(gen.forward_batch(4096, seed=7, p=0.3))
    assert big.shape == (4096, n_intnl_node)
    keep_big = float(big.mean())
    assert abs(keep_big - 0.7) < 0.02, keep_big

    # Stateful (torch-like) hot path: amortized, one launch per `prefetch` calls.
    m1 = jax.block_until_ready(gen.forward())
    m2 = jax.block_until_ready(gen.forward())
    assert m1.shape == (n_intnl_node,) and m2.shape == (n_intnl_node,)
    assert bool(jnp.all((m1 == 0.0) | (m1 == 1.0)))

    print("KERNEL_OK")
</pallas_src>

<mosaic_0001>
module attributes {stable_mosaic.version = 11 : i64} {
  func.func @_dropout_mask_kernel(%arg0: i32, %arg1: memref<1xi32, #tpu.memory_space<smem>>, %arg2: memref<1x128xf32, #tpu.memory_space<vmem>>) attributes {dimension_semantics = [#tpu.dimension_semantics<parallel>], iteration_bounds = array<i64: 1>, scalar_prefetch = 0 : i64, scratch_operands = 0 : i64, tpu.core_type = #tpu.core_type<tc>, window_params = [{transform_indices = @transform_0, window_bounds = array<i64: 1>}, {transform_indices = @transform_1, window_bounds = array<i64: 1, 128>}]} {
    %0 = tpu.iota {dimensions = array<i32: 0>} : vector<1x128xi32>
    %1 = tpu.iota {dimensions = array<i32: 1>} : vector<1x128xi32>
    %c0 = arith.constant 0 : index
    %2 = memref.load %arg1[%c0] : memref<1xi32, #tpu.memory_space<smem>>
    %c465362048_i32 = arith.constant 465362048 : i32
    %3 = arith.muli %arg0, %c465362048_i32 : i32
    %4 = arith.addi %2, %3 : i32
    %c465362048_i32_0 = arith.constant 465362048 : i32
    %5 = vector.broadcast %c465362048_i32_0 : i32 to vector<1x128xi32>
    %6 = arith.muli %0, %5 : vector<1x128xi32>
    %7 = vector.broadcast %4 : i32 to vector<1x128xi32>
    %8 = arith.addi %7, %6 : vector<1x128xi32>
    %c-1640531527_i32 = arith.constant -1640531527 : i32
    %9 = vector.broadcast %c-1640531527_i32 : i32 to vector<1x128xi32>
    %10 = arith.muli %1, %9 : vector<1x128xi32>
    %11 = arith.addi %8, %10 : vector<1x128xi32>
    %c16_i32 = arith.constant 16 : i32
    %12 = vector.broadcast %c16_i32 : i32 to vector<1x128xi32>
    %13 = arith.shrui %11, %12 : vector<1x128xi32>
    %14 = arith.xori %11, %13 : vector<1x128xi32>
    %c2146121005_i32 = arith.constant 2146121005 : i32
    %15 = vector.broadcast %c2146121005_i32 : i32 to vector<1x128xi32>
    %16 = arith.muli %14, %15 : vector<1x128xi32>
    %c15_i32 = arith.constant 15 : i32
    %17 = vector.broadcast %c15_i32 : i32 to vector<1x128xi32>
    %18 = arith.shrui %16, %17 : vector<1x128xi32>
    %19 = arith.xori %16, %18 : vector<1x128xi32>
    %c-2073254261_i32 = arith.constant -2073254261 : i32
    %20 = vector.broadcast %c-2073254261_i32 : i32 to vector<1x128xi32>
    %21 = arith.muli %19, %20 : vector<1x128xi32>
    %c16_i32_1 = arith.constant 16 : i32
    %22 = vector.broadcast %c16_i32_1 : i32 to vector<1x128xi32>
    %23 = arith.shrui %21, %22 : vector<1x128xi32>
    %24 = arith.xori %21, %23 : vector<1x128xi32>
    %c9_i32 = arith.constant 9 : i32
    %25 = vector.broadcast %c9_i32 : i32 to vector<1x128xi32>
    %26 = arith.shrui %24, %25 : vector<1x128xi32>
    %c838861_i32 = arith.constant 838861 : i32
    %27 = vector.broadcast %c838861_i32 : i32 to vector<1x128xi32>
    %28 = arith.cmpi sge, %26, %27 : vector<1x128xi32>
    %29 = arith.extui %28 : vector<1x128xi1> to vector<1x128xi32>
    %30 = arith.sitofp %29 : vector<1x128xi32> to vector<1x128xf32>
    %c0_2 = arith.constant 0 : index
    %c0_3 = arith.constant 0 : index
    %31 = vector.load %arg2[%c0_2, %c0_3] : memref<1x128xf32, #tpu.memory_space<vmem>>, vector<1x128xf32>
    tpu.vector_store %arg2[%c0_2, %c0_3], %30 {strides = array<i32>} : memref<1x128xf32, #tpu.memory_space<vmem>>, vector<1x128xf32>,
    return
  }
  func.func @transform_0(%arg0: i32) -> i32 {
    %c0_i32 = arith.constant 0 : i32
    %c0_i32_0 = arith.constant 0 : i32
    return %c0_i32 : i32
  }
  func.func @transform_1(%arg0: i32) -> (i32, i32) {
    %c0_i32 = arith.constant 0 : i32
    %c0_i32_0 = arith.constant 0 : i32
    return %arg0, %c0_i32 : i32, i32
  }
}

</mosaic_0001>

<llo_original>
// kernel: run.1
$region0: #{run.1}
  #allocation0 [shape = 'u32[]', space=smem, size = 0x4, offset = 0x4, fixed_abs, tag = 'smem constant byte address 0x4 - core index']
  #allocation1 [shape = 'u32[144,128]{1,0:T(1,128)}', space=vmem, size = 0x12000, scoped, tag = 'internal scratch']
  #allocation2 [shape = 's32[1]{0:T(128)S(6)}', space=smem, size = 0x200, scoped, tag = 'scoped memory for run.1']
  %s0 = inlined_call_operand.<no memory space> [shape: s32[1], index: 0, kind: input, shape index: {}]
  %s1 = inlined_call_operand.hbm [shape: f32[1,128], index: 1, kind: output, shape index: {}]
  %s2 = sld [smem:[#allocation0]]
  $region14: #{run.1} parent=0
    _
  %s4 = ssub.s32 1, %s2
  %s5 = scalar_select 0, %s4, %s2
  %6 = sst [smem:[#allocation2]] %s0
  $region1: #{run.1} parent=0
    #allocation3 [shape = 'u8[512]{0}', space=vmem, size = 0x400, scoped, tag = 'output window, operand 0, single buffered']
    #allocation4 [shape = 's32[1]{0}', space=sflag, size = 0x4, scoped, tag = 'scoped memory for run.1']
    %7 = vsyncpa [#allocation4], 0
    // Predicated region
    $region2: #{run.1} parent=1 // pred_check
      _
    $region3: #{run.1} parent=1 // pred_check_branch
      %9 = sbr.rel (0) target = $region5
    $region4: #{run.1} parent=1 // pred_region
      _
    $region5: #{run.1} parent=1 // pred_fallthru
      _
    %v10 = vlaneseq
    %v11 = vshrl.u32 %v10, 7
    %v12 = vlaneseq
    %v13 = vand.u32 %v12, 127
    %s14 = sld [smem:[#allocation2]]
    %s15 = smul.u32 0, 465362048
    %s16 = sadd.s32 %s14, %s15
    %v17 = vmul.u32 %v11, 465362048
    %v18 = vstv %s16
    %v19 = vadd.s32 %v18, %v17
    %v20 = vmul.u32 %v13, 2654435769
    %v21 = vadd.s32 %v19, %v20
    %v22 = vshrl.u32 %v21, 16
    %v23 = vxor.u32 %v21, %v22
    %v24 = vmul.u32 %v23, 2146121005
    %v25 = vshrl.u32 %v24, 15
    %v26 = vxor.u32 %v24, %v25
    %v27 = vmul.u32 %v26, 2221713035
    %v28 = vshrl.u32 %v27, 16
    %v29 = vxor.u32 %v27, %v28
    %v30 = vshrl.u32 %v29, 9
    %vm31 = vcmp.ge.s32.totalorder %v30, 838861
    %v32 = vsel %vm31, 1, 0
    %v33 = vcvt.s32.f32 %v32
    %34 = vst [vmem:[#allocation3] sm:$0x1] %v33
    // Predicated region
    $region6: #{run.1} parent=1 // pred_check
      _
    $region7: #{run.1} parent=1 // pred_check_branch
      %36 = sbr.rel (0) target = $region9
    $region8: #{run.1} parent=1 // pred_region
      %s38 = ssub.s32 16, 16
      %39 = vsyncadd [#allocation4], %s38
      %s41 = sshll.u32 [#allocation3], 4
      %s42 = int_to_ptr.vmem [resolvable:$true] %s41
      %44 = dma.vmem_to_hbm [thread:$0]  %s42, 16, %s1, [#allocation4]
    $region9: #{run.1} parent=1 // pred_fallthru
      _
    // Predicated region
    $region10: #{run.1} parent=1 // pred_check
      _
    $region11: #{run.1} parent=1 // pred_check_branch
      %46 = sbr.rel (0) target = $region13
    $region12: #{run.1} parent=1 // pred_region
      %47 = dma.done [#allocation4], 16
    $region13: #{run.1} parent=1 // pred_fallthru
      _
    %48 = vsyncpa [#allocation4], 1

</llo_original>
